<compile_context>
chip_gen: v7x
topology: tpu7x:2x2x1
jax: 0.10.0
libtpu: 0.0.40
codegen_flags: <defaults>
</compile_context>

<pallas_src>
import jax
import jax.numpy as jnp
from jax.experimental import pallas as pl
from jax.experimental.pallas import tpu as pltpu


# ----------------------------- Pallas kernel --------------------------------

def _policy_kernel(x_ref, w1_ref, b1_ref, w2_ref, b2_ref, w3_ref, b3_ref,
                   w4_ref, b4_ref, w5_ref, b5_ref, o_ref):
    """Fused 5-layer dense+ReLU network; activations stay in vregs."""
    def layer(h, w_ref, b_ref):
        acc = jnp.dot(h, w_ref[...], preferred_element_type=jnp.float32)
        return jnp.maximum(acc + b_ref[...], 0.0)

    h = layer(x_ref[...], w1_ref, b1_ref)   # conv1 (k=3,p=1) -> center tap only
    h = layer(h, w2_ref, b2_ref)            # conv2 (k=3,p=1) -> center tap only
    h = layer(h, w3_ref, b3_ref)            # conv3 (k=1)
    h = layer(h, w4_ref, b4_ref)            # fc1
    o_ref[...] = layer(h, w5_ref, b5_ref)   # fc2 (lane-padded output)


# --------------------------- one-time param packing ---------------------------

def pack_params(params):
    """Repack torch-layout params into the kernel layout ONCE (not per call)."""
    f32 = jnp.float32
    n_output = params["w5"].shape[0]
    n_pad = ((n_output + 127) // 128) * 128          # lane-dense output width
    w5p = jnp.zeros((256, n_pad), f32).at[:, :n_output].set(
        jnp.transpose(params["w5"]).astype(f32))
    b5p = jnp.zeros((1, n_pad), f32).at[:, :n_output].set(
        params["b5"].astype(f32))
    return {
        # conv k=3,p=1 at L==1: only the center tap (index 1) contributes.
        "w1c": jnp.transpose(params["w1"][:, :, 1]).astype(f32),   # (n_in, 256)
        "b1":  params["b1"].reshape(1, 256).astype(f32),
        "w2c": jnp.transpose(params["w2"][:, :, 1]).astype(f32),   # (256, 256)
        "b2":  params["b2"].reshape(1, 256).astype(f32),
        "w3c": jnp.transpose(params["w3"][:, :, 0]).astype(f32),   # (256, 256)
        "b3":  params["b3"].reshape(1, 256).astype(f32),
        "w4t": jnp.transpose(params["w4"]).astype(f32),            # (256, 256)
        "b4":  params["b4"].reshape(1, 256).astype(f32),
        "w5p": w5p,                                                # (256, n_pad)
        "b5p": b5p,                                                # (1, n_pad)
    }


def _weight_args(packed):
    return (packed["w1c"], packed["b1"], packed["w2c"], packed["b2"],
            packed["w3c"], packed["b3"], packed["w4t"], packed["b4"],
            packed["w5p"], packed["b5p"])


# ------------------------------ forward passes --------------------------------

def policy_forward(packed, x, n_output):
    """x: (L, n_input) float32; returns (n_output,).  Matches the torch module."""
    assert x.shape[0] == 1, "Flatten(start_dim=0)+Linear(256,.) requires L == 1"
    n_pad = packed["w5p"].shape[1]
    # No grid: single block, every operand is a full-array VMEM-resident ref.
    out = pl.pallas_call(
        _policy_kernel,
        out_shape=jax.ShapeDtypeStruct((1, n_pad), jnp.float32),
    )(x.astype(jnp.float32), *_weight_args(packed))
    return out[0, :n_output]


def policy_forward_batched(packed, xb, n_output, batch_tile=128):
    """xb: (B, n_input) — B independent single-timestep observations.

    Weights use a constant index_map so they are DMA'd once and stay resident
    in VMEM across the batch grid; the batch axis is 'parallel' (megacore /
    v7x two-TC sharding) and the batch tile fills the MXU rows.
    """
    B, n_in = xb.shape
    tb = min(batch_tile, B)
    b_pad = ((B + tb - 1) // tb) * tb
    if b_pad != B:
        xb = jnp.pad(xb, ((0, b_pad - B), (0, 0)))
    n_pad = packed["w5p"].shape[1]

    def wspec(shape):
        return pl.BlockSpec(shape, lambda i: (0, 0))   # constant -> DMA'd once

    out = pl.pallas_call(
        _policy_kernel,
        out_shape=jax.ShapeDtypeStruct((b_pad, n_pad), jnp.float32),
        grid=(b_pad // tb,),
        in_specs=[
            pl.BlockSpec((tb, n_in), lambda i: (i, 0)),
            wspec((n_in, 256)), wspec((1, 256)),
            wspec((256, 256)), wspec((1, 256)),
            wspec((256, 256)), wspec((1, 256)),
            wspec((256, 256)), wspec((1, 256)),
            wspec((256, n_pad)), wspec((1, n_pad)),
        ],
        out_specs=pl.BlockSpec((tb, n_pad), lambda i: (i, 0)),
        compiler_params=pltpu.CompilerParams(
            dimension_semantics=("parallel",)),
    )(xb.astype(jnp.float32), *_weight_args(packed))
    return out[:B, :n_output]


# ------------------------- reference (pure JAX) -------------------------------

def ref_forward(params, x):
    y = x.astype(jnp.float32)[None].transpose(0, 2, 1)          # (1, n_in, L)

    def conv(y, w, b, pad):
        out = jax.lax.conv_general_dilated(
            y, w, window_strides=(1,), padding=[(pad, pad)],
            dimension_numbers=("NCH", "OIH", "NCH"))
        return jnp.maximum(out + b[None, :, None], 0.0)

    y = conv(y, params["w1"], params["b1"], 1)
    y = conv(y, params["w2"], params["b2"], 1)
    y = conv(y, params["w3"], params["b3"], 0)
    v = y.reshape(-1)                                           # Flatten(start_dim=0)
    v = jnp.maximum(params["w4"] @ v + params["b4"], 0.0)
    v = jnp.maximum(params["w5"] @ v + params["b5"], 0.0)
    return v


# ------------------------------ parameters -----------------------------------

def init_params(key, n_input, n_output):
    ks = jax.random.split(key, 10)

    def u(k, shape, fan_in):  # torch default: U(-1/sqrt(fan_in), 1/sqrt(fan_in))
        bound = 1.0 / jnp.sqrt(jnp.float32(fan_in))
        return jax.random.uniform(k, shape, jnp.float32, -bound, bound)

    return {
        "w1": u(ks[0], (256, n_input, 3), 3 * n_input), "b1": u(ks[1], (256,), 3 * n_input),
        "w2": u(ks[2], (256, 256, 3), 3 * 256),         "b2": u(ks[3], (256,), 3 * 256),
        "w3": u(ks[4], (256, 256, 1), 256),             "b3": u(ks[5], (256,), 256),
        "w4": u(ks[6], (256, 256), 256),                "b4": u(ks[7], (256,), 256),
        "w5": u(ks[8], (n_output, 256), 256),           "b5": u(ks[9], (n_output,), 256),
    }


if __name__ == "__main__":
    n_input, n_output = 16, 8
    key = jax.random.PRNGKey(0)
    pkey, xkey, bkey = jax.random.split(key, 3)

    params = init_params(pkey, n_input, n_output)
    packed = pack_params(params)          # one-time weight repack

    # --- single observation (exactly the PyTorch forward, L == 1) -----------
    x = jax.random.normal(xkey, (1, n_input), jnp.float32)
    out = jax.block_until_ready(policy_forward(packed, x, n_output))
    ref = jax.block_until_ready(ref_forward(params, x))
    assert out.shape == (n_output,), out.shape
    assert jnp.all(jnp.isfinite(out))
    assert jnp.allclose(out, ref, atol=1e-3, rtol=1e-3), (out, ref)

    # --- batched ES-population evaluation (one weight load, MXU-filling) ----
    B = 256
    xb = jax.random.normal(bkey, (B, n_input), jnp.float32)
    outb = jax.block_until_ready(policy_forward_batched(packed, xb, n_output))
    refb = jax.vmap(lambda xi: ref_forward(params, xi[None, :]))(xb)
    assert outb.shape == (B, n_output), outb.shape
    assert jnp.allclose(outb, refb, atol=1e-3, rtol=1e-3), \
        float(jnp.max(jnp.abs(outb - refb)))

    print("KERNEL_OK")
</pallas_src>

<mosaic_0001>
module attributes {stable_mosaic.version = 11 : i64} {
  func.func @_policy_kernel(%arg0: memref<1x16xf32, #tpu.memory_space<vmem>>, %arg1: memref<16x256xf32, #tpu.memory_space<vmem>>, %arg2: memref<1x256xf32, #tpu.memory_space<vmem>>, %arg3: memref<256x256xf32, #tpu.memory_space<vmem>>, %arg4: memref<1x256xf32, #tpu.memory_space<vmem>>, %arg5: memref<256x256xf32, #tpu.memory_space<vmem>>, %arg6: memref<1x256xf32, #tpu.memory_space<vmem>>, %arg7: memref<256x256xf32, #tpu.memory_space<vmem>>, %arg8: memref<1x256xf32, #tpu.memory_space<vmem>>, %arg9: memref<256x128xf32, #tpu.memory_space<vmem>>, %arg10: memref<1x128xf32, #tpu.memory_space<vmem>>, %arg11: memref<1x128xf32, #tpu.memory_space<vmem>>) attributes {dimension_semantics = [], scalar_prefetch = 0 : i64, scratch_operands = 0 : i64, tpu.core_type = #tpu.core_type<tc>} {
    %c0 = arith.constant 0 : index
    %c0_0 = arith.constant 0 : index
    %0 = vector.load %arg0[%c0, %c0_0] : memref<1x16xf32, #tpu.memory_space<vmem>>, vector<1x16xf32>
    %c0_1 = arith.constant 0 : index
    %c0_2 = arith.constant 0 : index
    %1 = vector.load %arg1[%c0_1, %c0_2] : memref<16x256xf32, #tpu.memory_space<vmem>>, vector<16x256xf32>
    %cst = arith.constant dense<0.000000e+00> : vector<1x256xf32>
    %2 = tpu.matmul %0, %1, %cst {dimension_numbers = #tpu.dot_dimension_numbers<[1], [0], [0], [1], [0, 0, 1, 1], [], []>} : vector<1x16xf32>, vector<16x256xf32>, vector<1x256xf32> -> vector<1x256xf32>
    %c0_3 = arith.constant 0 : index
    %c0_4 = arith.constant 0 : index
    %3 = vector.load %arg2[%c0_3, %c0_4] : memref<1x256xf32, #tpu.memory_space<vmem>>, vector<1x256xf32>
    %4 = arith.addf %2, %3 : vector<1x256xf32>
    %cst_5 = arith.constant 0.000000e+00 : f32
    %5 = vector.broadcast %cst_5 : f32 to vector<1x256xf32>
    %6 = arith.maximumf %4, %5 : vector<1x256xf32>
    %c0_6 = arith.constant 0 : index
    %c0_7 = arith.constant 0 : index
    %7 = vector.load %arg3[%c0_6, %c0_7] : memref<256x256xf32, #tpu.memory_space<vmem>>, vector<256x256xf32>
    %cst_8 = arith.constant dense<0.000000e+00> : vector<1x256xf32>
    %8 = tpu.matmul %6, %7, %cst_8 {dimension_numbers = #tpu.dot_dimension_numbers<[1], [0], [0], [1], [0, 0, 1, 1], [], []>} : vector<1x256xf32>, vector<256x256xf32>, vector<1x256xf32> -> vector<1x256xf32>
    %c0_9 = arith.constant 0 : index
    %c0_10 = arith.constant 0 : index
    %9 = vector.load %arg4[%c0_9, %c0_10] : memref<1x256xf32, #tpu.memory_space<vmem>>, vector<1x256xf32>
    %10 = arith.addf %8, %9 : vector<1x256xf32>
    %cst_11 = arith.constant 0.000000e+00 : f32
    %11 = vector.broadcast %cst_11 : f32 to vector<1x256xf32>
    %12 = arith.maximumf %10, %11 : vector<1x256xf32>
    %c0_12 = arith.constant 0 : index
    %c0_13 = arith.constant 0 : index
    %13 = vector.load %arg5[%c0_12, %c0_13] : memref<256x256xf32, #tpu.memory_space<vmem>>, vector<256x256xf32>
    %cst_14 = arith.constant dense<0.000000e+00> : vector<1x256xf32>
    %14 = tpu.matmul %12, %13, %cst_14 {dimension_numbers = #tpu.dot_dimension_numbers<[1], [0], [0], [1], [0, 0, 1, 1], [], []>} : vector<1x256xf32>, vector<256x256xf32>, vector<1x256xf32> -> vector<1x256xf32>
    %c0_15 = arith.constant 0 : index
    %c0_16 = arith.constant 0 : index
    %15 = vector.load %arg6[%c0_15, %c0_16] : memref<1x256xf32, #tpu.memory_space<vmem>>, vector<1x256xf32>
    %16 = arith.addf %14, %15 : vector<1x256xf32>
    %cst_17 = arith.constant 0.000000e+00 : f32
    %17 = vector.broadcast %cst_17 : f32 to vector<1x256xf32>
    %18 = arith.maximumf %16, %17 : vector<1x256xf32>
    %c0_18 = arith.constant 0 : index
    %c0_19 = arith.constant 0 : index
    %19 = vector.load %arg7[%c0_18, %c0_19] : memref<256x256xf32, #tpu.memory_space<vmem>>, vector<256x256xf32>
    %cst_20 = arith.constant dense<0.000000e+00> : vector<1x256xf32>
    %20 = tpu.matmul %18, %19, %cst_20 {dimension_numbers = #tpu.dot_dimension_numbers<[1], [0], [0], [1], [0, 0, 1, 1], [], []>} : vector<1x256xf32>, vector<256x256xf32>, vector<1x256xf32> -> vector<1x256xf32>
    %c0_21 = arith.constant 0 : index
    %c0_22 = arith.constant 0 : index
    %21 = vector.load %arg8[%c0_21, %c0_22] : memref<1x256xf32, #tpu.memory_space<vmem>>, vector<1x256xf32>
    %22 = arith.addf %20, %21 : vector<1x256xf32>
    %cst_23 = arith.constant 0.000000e+00 : f32
    %23 = vector.broadcast %cst_23 : f32 to vector<1x256xf32>
    %24 = arith.maximumf %22, %23 : vector<1x256xf32>
    %c0_24 = arith.constant 0 : index
    %c0_25 = arith.constant 0 : index
    %25 = vector.load %arg9[%c0_24, %c0_25] : memref<256x128xf32, #tpu.memory_space<vmem>>, vector<256x128xf32>
    %cst_26 = arith.constant dense<0.000000e+00> : vector<1x128xf32>
    %26 = tpu.matmul %24, %25, %cst_26 {dimension_numbers = #tpu.dot_dimension_numbers<[1], [0], [0], [1], [0, 0, 1, 1], [], []>} : vector<1x256xf32>, vector<256x128xf32>, vector<1x128xf32> -> vector<1x128xf32>
    %c0_27 = arith.constant 0 : index
    %c0_28 = arith.constant 0 : index
    %27 = vector.load %arg10[%c0_27, %c0_28] : memref<1x128xf32, #tpu.memory_space<vmem>>, vector<1x128xf32>
    %28 = arith.addf %26, %27 : vector<1x128xf32>
    %cst_29 = arith.constant 0.000000e+00 : f32
    %29 = vector.broadcast %cst_29 : f32 to vector<1x128xf32>
    %30 = arith.maximumf %28, %29 : vector<1x128xf32>
    %c0_30 = arith.constant 0 : index
    %c0_31 = arith.constant 0 : index
    %31 = vector.load %arg11[%c0_30, %c0_31] : memref<1x128xf32, #tpu.memory_space<vmem>>, vector<1x128xf32>
    tpu.vector_store %arg11[%c0_30, %c0_31], %30 {strides = array<i32>} : memref<1x128xf32, #tpu.memory_space<vmem>>, vector<1x128xf32>,
    return
  }
}

</mosaic_0001>

<llo_original>
// kernel: tpu_custom_call.1
$region0: #{tpu_custom_call.1}
  #allocation0 [shape = 'u32[]', space=smem, size = 0x4, offset = 0x4, fixed_abs, tag = 'smem constant byte address 0x4 - core index']
  #allocation1 [shape = 'u32[144,128]{1,0:T(1,128)}', space=vmem, size = 0x12000, scoped, tag = 'internal scratch']
  %s0 = inlined_call_operand.hbm [shape: f32[1,16], index: 0, kind: input, shape index: {}]
  %s1 = inlined_call_operand.hbm [shape: f32[16,256], index: 1, kind: input, shape index: {}]
  %s2 = inlined_call_operand.vmem [shape: f32[1,256], index: 2, kind: input, shape index: {}]
  %s3 = inlined_call_operand.hbm [shape: f32[256,256], index: 3, kind: input, shape index: {}]
  %s4 = inlined_call_operand.vmem [shape: f32[1,256], index: 4, kind: input, shape index: {}]
  %s5 = inlined_call_operand.hbm [shape: f32[256,256], index: 5, kind: input, shape index: {}]
  %s6 = inlined_call_operand.vmem [shape: f32[1,256], index: 6, kind: input, shape index: {}]
  %s7 = inlined_call_operand.hbm [shape: f32[256,256], index: 7, kind: input, shape index: {}]
  %s8 = inlined_call_operand.vmem [shape: f32[1,256], index: 8, kind: input, shape index: {}]
  %s9 = inlined_call_operand.hbm [shape: f32[256,128], index: 9, kind: input, shape index: {}]
  %s10 = inlined_call_operand.vmem [shape: f32[1,128], index: 10, kind: input, shape index: {}]
  %s11 = inlined_call_operand.hbm [shape: f32[1,128], index: 11, kind: output, shape index: {}]
  %s12 = sld [smem:[#allocation0]]
  $region78: #{tpu_custom_call.1} parent=0
    _
  %s14 = ssub.s32 1, %s12
  %s15 = scalar_select 0, %s14, %s12
  $region1: #{tpu_custom_call.1} parent=0
    #allocation2 [shape = 'u8[512]{0}', space=vmem, size = 0x400, scoped, tag = 'input window, operand 0, single buffered']
    #allocation3 [shape = 's32[1]{0}', space=sflag, size = 0x4, scoped, tag = 'scoped memory for tpu_custom_call.1']
    #allocation4 [shape = 's32[1]{0}', space=sflag, size = 0x4, scoped, tag = 'scoped memory for tpu_custom_call.1']
    #allocation5 [shape = 'u8[16384]{0}', space=vmem, size = 0x4000, scoped, tag = 'input window, operand 1, single buffered']
    #allocation6 [shape = 's32[1]{0}', space=sflag, size = 0x4, scoped, tag = 'scoped memory for tpu_custom_call.1']
    #allocation7 [shape = 'u8[262144]{0}', space=vmem, size = 0x40000, scoped, tag = 'input window, operand 3, single buffered']
    #allocation8 [shape = 'u8[262144]{0}', space=vmem, size = 0x40000, scoped, tag = 'input window, operand 5, single buffered']
    #allocation9 [shape = 's32[1]{0}', space=sflag, size = 0x4, scoped, tag = 'scoped memory for tpu_custom_call.1']
    #allocation10 [shape = 'u8[262144]{0}', space=vmem, size = 0x40000, scoped, tag = 'input window, operand 7, single buffered']
    #allocation11 [shape = 'u8[131072]{0}', space=vmem, size = 0x20000, scoped, tag = 'input window, operand 9, single buffered']
    #allocation12 [shape = 's32[1]{0}', space=sflag, size = 0x4, scoped, tag = 'scoped memory for tpu_custom_call.1']
    #allocation13 [shape = 'u8[512]{0}', space=vmem, size = 0x400, scoped, tag = 'output window, operand 0, single buffered']
    %16 = vsyncpa [#allocation3], 0
    %17 = vsyncpa [#allocation6], 0
    %18 = vsyncpa [#allocation9], 0
    %19 = vsyncpa [#allocation12], 0
    %20 = vsyncpa [#allocation4], 0
    // Predicated region
    $region2: #{tpu_custom_call.1} parent=1 // pred_check
      _
    $region3: #{tpu_custom_call.1} parent=1 // pred_check_branch
      %22 = sbr.rel (0) target = $region5
    $region4: #{tpu_custom_call.1} parent=1 // pred_region
      %s24 = ssub.s32 16, 16
      %25 = vsyncadd [#allocation3], %s24
      %s27 = sshll.u32 [#allocation2], 4
      %s28 = int_to_ptr.vmem [resolvable:$true] %s27
      %30 = dma.hbm_to_vmem [thread:$0]  %s0, 16, %s28, [#allocation3]
    $region5: #{tpu_custom_call.1} parent=1 // pred_fallthru
      _
    // Predicated region
    $region6: #{tpu_custom_call.1} parent=1 // pred_check
      _
    $region7: #{tpu_custom_call.1} parent=1 // pred_check_branch
      %32 = sbr.rel (0) target = $region9
    $region8: #{tpu_custom_call.1} parent=1 // pred_region
      %s34 = ssub.s32 512, 512
      %35 = vsyncadd [#allocation6], %s34
      %s36 = sshll.u32 [#allocation5], 4
      %s37 = int_to_ptr.vmem [resolvable:$true] %s36
      %42 = dma.hbm_to_vmem [thread:$0]  %s1, 512, %s37, [#allocation6], 256, 256, 16
    $region9: #{tpu_custom_call.1} parent=1 // pred_fallthru
      _
    // Predicated region
    $region10: #{tpu_custom_call.1} parent=1 // pred_check
      _
    $region11: #{tpu_custom_call.1} parent=1 // pred_check_branch
      %44 = sbr.rel (0) target = $region13
    $region12: #{tpu_custom_call.1} parent=1 // pred_region
      _
    $region13: #{tpu_custom_call.1} parent=1 // pred_fallthru
      _
    // Predicated region
    $region14: #{tpu_custom_call.1} parent=1 // pred_check
      _
    $region15: #{tpu_custom_call.1} parent=1 // pred_check_branch
      %46 = sbr.rel (0) target = $region17
    $region16: #{tpu_custom_call.1} parent=1 // pred_region
      %s48 = ssub.s32 8192, 8192
      %49 = vsyncadd [#allocation6], %s48
      %s50 = sshll.u32 [#allocation7], 4
      %s51 = int_to_ptr.vmem [resolvable:$true] %s50
      %56 = dma.hbm_to_vmem [thread:$0]  %s3, 8192, %s51, [#allocation6], 256, 256, 16
    $region17: #{tpu_custom_call.1} parent=1 // pred_fallthru
      _
    // Predicated region
    $region18: #{tpu_custom_call.1} parent=1 // pred_check
      _
    $region19: #{tpu_custom_call.1} parent=1 // pred_check_branch
      %58 = sbr.rel (0) target = $region21
    $region20: #{tpu_custom_call.1} parent=1 // pred_region
      _
    $region21: #{tpu_custom_call.1} parent=1 // pred_fallthru
      _
    // Predicated region
    $region22: #{tpu_custom_call.1} parent=1 // pred_check
      _
    $region23: #{tpu_custom_call.1} parent=1 // pred_check_branch
      %60 = sbr.rel (0) target = $region25
    $region24: #{tpu_custom_call.1} parent=1 // pred_region
      %s62 = ssub.s32 8192, 8192
      %63 = vsyncadd [#allocation9], %s62
      %s64 = sshll.u32 [#allocation8], 4
      %s65 = int_to_ptr.vmem [resolvable:$true] %s64
      %70 = dma.hbm_to_vmem [thread:$0]  %s5, 8192, %s65, [#allocation9], 256, 256, 16
    $region25: #{tpu_custom_call.1} parent=1 // pred_fallthru
      _
    // Predicated region
    $region26: #{tpu_custom_call.1} parent=1 // pred_check
      _
    $region27: #{tpu_custom_call.1} parent=1 // pred_check_branch
      %72 = sbr.rel (0) target = $region29
    $region28: #{tpu_custom_call.1} parent=1 // pred_region
      _
    $region29: #{tpu_custom_call.1} parent=1 // pred_fallthru
      _
    // Predicated region
    $region30: #{tpu_custom_call.1} parent=1 // pred_check
      _
    $region31: #{tpu_custom_call.1} parent=1 // pred_check_branch
      %74 = sbr.rel (0) target = $region33
    $region32: #{tpu_custom_call.1} parent=1 // pred_region
      %s76 = ssub.s32 8192, 8192
      %77 = vsyncadd [#allocation9], %s76
      %s78 = sshll.u32 [#allocation10], 4
      %s79 = int_to_ptr.vmem [resolvable:$true] %s78
      %84 = dma.hbm_to_vmem [thread:$0]  %s7, 8192, %s79, [#allocation9], 256, 256, 16
    $region33: #{tpu_custom_call.1} parent=1 // pred_fallthru
      _
    // Predicated region
    $region34: #{tpu_custom_call.1} parent=1 // pred_check
      _
    $region35: #{tpu_custom_call.1} parent=1 // pred_check_branch
      %86 = sbr.rel (0) target = $region37
    $region36: #{tpu_custom_call.1} parent=1 // pred_region
      _
    $region37: #{tpu_custom_call.1} parent=1 // pred_fallthru
      _
    // Predicated region
    $region38: #{tpu_custom_call.1} parent=1 // pred_check
      _
    $region39: #{tpu_custom_call.1} parent=1 // pred_check_branch
      %88 = sbr.rel (0) target = $region41
    $region40: #{tpu_custom_call.1} parent=1 // pred_region
      %s90 = ssub.s32 4096, 4096
      %91 = vsyncadd [#allocation12], %s90
      %s92 = sshll.u32 [#allocation11], 4
      %s93 = int_to_ptr.vmem [resolvable:$true] %s92
      %98 = dma.hbm_to_vmem [thread:$0]  %s9, 4096, %s93, [#allocation12], 128, 128, 8
    $region41: #{tpu_custom_call.1} parent=1 // pred_fallthru
      _
    // Predicated region
    $region42: #{tpu_custom_call.1} parent=1 // pred_check
      _
    $region43: #{tpu_custom_call.1} parent=1 // pred_check_branch
      %100 = sbr.rel (0) target = $region45
    $region44: #{tpu_custom_call.1} parent=1 // pred_region
      _
    $region45: #{tpu_custom_call.1} parent=1 // pred_fallthru
      _
    // Predicated region
    $region46: #{tpu_custom_call.1} parent=1 // pred_check
      _
    $region47: #{tpu_custom_call.1} parent=1 // pred_check_branch
      %102 = sbr.rel (0) target = $region49
    $region48: #{tpu_custom_call.1} parent=1 // pred_region
      %103 = dma.done [#allocation3], 16
    $region49: #{tpu_custom_call.1} parent=1 // pred_fallthru
      _
    // Predicated region
    $region50: #{tpu_custom_call.1} parent=1 // pred_check
      _
    $region51: #{tpu_custom_call.1} parent=1 // pred_check_branch
      %105 = sbr.rel (0) target = $region53
    $region52: #{tpu_custom_call.1} parent=1 // pred_region
      %106 = dma.done [#allocation6], 512
    $region53: #{tpu_custom_call.1} parent=1 // pred_fallthru
      _
    // Predicated region
    $region54: #{tpu_custom_call.1} parent=1 // pred_check
      _
    $region55: #{tpu_custom_call.1} parent=1 // pred_check_branch
      %108 = sbr.rel (0) target = $region57
    $region56: #{tpu_custom_call.1} parent=1 // pred_region
      %109 = dma.done [#allocation6], 8192
    $region57: #{tpu_custom_call.1} parent=1 // pred_fallthru
      _
    // Predicated region
    $region58: #{tpu_custom_call.1} parent=1 // pred_check
      _
    $region59: #{tpu_custom_call.1} parent=1 // pred_check_branch
      %111 = sbr.rel (0) target = $region61
    $region60: #{tpu_custom_call.1} parent=1 // pred_region
      %112 = dma.done [#allocation9], 8192
    $region61: #{tpu_custom_call.1} parent=1 // pred_fallthru
      _
    // Predicated region
    $region62: #{tpu_custom_call.1} parent=1 // pred_check
      _
    $region63: #{tpu_custom_call.1} parent=1 // pred_check_branch
      %114 = sbr.rel (0) target = $region65
    $region64: #{tpu_custom_call.1} parent=1 // pred_region
      %115 = dma.done [#allocation9], 8192
    $region65: #{tpu_custom_call.1} parent=1 // pred_fallthru
      _
    // Predicated region
    $region66: #{tpu_custom_call.1} parent=1 // pred_check
      _
    $region67: #{tpu_custom_call.1} parent=1 // pred_check_branch
      %117 = sbr.rel (0) target = $region69
    $region68: #{tpu_custom_call.1} parent=1 // pred_region
      %118 = dma.done [#allocation12], 4096
    $region69: #{tpu_custom_call.1} parent=1 // pred_fallthru
      _
    %v119 = vld [vmem:[#allocation2] sm:$0x1]
    %v120 = vld [vmem:[#allocation5] sm:$0xff]
    %v121 = vld [vmem:[#allocation5 + $0x8] sm:$0xff]
    %v122 = vld [vmem:[#allocation5 + $0x10] sm:$0xff]
    %v123 = vld [vmem:[#allocation5 + $0x18] sm:$0xff]
    %v124 = vld [vmem:[%s2] sm:$0x3]
    %v126 = vlaneseq
    %v127 = vshrl.u32 %v126, 7
    %v128 = vsub.s32 0, %v127
    %v129 = vrot.slane %v124, %v128
    %v130 = vlaneseq
    %v131 = vshrl.u32 %v130, 7
    %v132 = vsub.s32 1, %v131
    %v133 = vrot.slane %v124, %v132
    %vm136 = vcmask 130048
    %v138 = vsel %vm136, %v119, 0
    %140 = vmatprep.subr.mxu0 %v121
    %141 = vmatpush1.msra.mxu0 %v120
    %142 = vmatprep.subr.mxu0 %v123
    %143 = vmatpush1.msra.mxu0 %v122
    %144 = vmatprep.subr.mxu0 0.0
    %145 = vmatpush1.msra.mxu0 0.0
    %146 = vmatprep.subr.mxu0 0.0
    %147 = vmatpush1.msra.mxu0 0.0
    %148 = vmatprep.subr.mxu0 0.0
    %149 = vmatpush1.msra.mxu0 0.0
    %150 = vmatprep.subr.mxu0 0.0
    %151 = vmatpush1.msra.mxu0 0.0
    %152 = vmatprep.subr.mxu0 0.0
    %153 = vmatpush1.msra.mxu0 0.0
    %154 = vmatprep.subr.mxu0 0.0
    %155 = vmatpush1.msra.mxu0 0.0
    %156 = vmatprep.subr.mxu0 0.0
    %157 = vmatpush1.msra.mxu0 0.0
    %158 = vmatprep.subr.mxu0 0.0
    %159 = vmatpush1.msra.mxu0 0.0
    %160 = vmatprep.subr.mxu0 0.0
    %161 = vmatpush1.msra.mxu0 0.0
    %162 = vmatprep.subr.mxu0 0.0
    %163 = vmatpush1.msra.mxu0 0.0
    %164 = vmatprep.subr.mxu0 0.0
    %165 = vmatpush1.msra.mxu0 0.0
    %166 = vmatprep.subr.mxu0 0.0
    %167 = vmatpush1.msra.mxu0 0.0
    %168 = vmatprep.subr.mxu0 0.0
    %169 = vmatpush1.msra.mxu0 0.0
    %170 = vmatprep.subr.mxu0 0.0
    %171 = vmatpush1.msra.mxu0 0.0
    %172 = vmatprep.subr.mxu0 0.0
    %173 = vmatpush1.msra.mxu0 0.0
    %174 = vmatprep.subr.mxu0 0.0
    %175 = vmatpush1.msra.mxu0 0.0
    %176 = vmatprep.subr.mxu0 0.0
    %177 = vmatpush1.msra.mxu0 0.0
    %178 = vmatprep.subr.mxu0 0.0
    %179 = vmatpush1.msra.mxu0 0.0
    %180 = vmatprep.subr.mxu0 0.0
    %181 = vmatpush1.msra.mxu0 0.0
    %182 = vmatprep.subr.mxu0 0.0
    %183 = vmatpush1.msra.mxu0 0.0
    %184 = vmatprep.subr.mxu0 0.0
    %185 = vmatpush1.msra.mxu0 0.0
    %186 = vmatprep.subr.mxu0 0.0
    %187 = vmatpush1.msra.mxu0 0.0
    %188 = vmatprep.subr.mxu0 0.0
    %189 = vmatpush1.msra.mxu0 0.0
    %190 = vmatprep.subr.mxu0 0.0
    %191 = vmatpush1.msra.mxu0 0.0
    %192 = vmatprep.subr.mxu0 0.0
    %193 = vmatpush1.msra.mxu0 0.0
    %194 = vmatprep.subr.mxu0 0.0
    %195 = vmatpush1.msra.mxu0 0.0
    %196 = vmatprep.subr.mxu0 0.0
    %197 = vmatpush1.msra.mxu0 0.0
    %198 = vmatprep.subr.mxu0 0.0
    %199 = vmatpush1.msra.mxu0 0.0
    %200 = vmatprep.subr.mxu0 0.0
    %201 = vmatpush1.msra.mxu0 0.0
    %202 = vmatprep.subr.mxu0 0.0
    %203 = vmatpush1.msra.mxu0 0.0
    %204 = vmatprep.mubr.f32.mxu0 0.0
    %205 = vmatmul.mubr.f32.gmra.mrb[0].mxu0 %v138
    %v206 = vpop.f32.mrb[0].mxu0
    %v207 = vadd.f32 %v129, %v206
    %v208 = vpop.f32.mrb[0].mxu0
    %v209 = vadd.f32 %v133, %v208
    %210 = vdwg.mxu0
    %v211 = vmax.f32 %v207, 0.0
    %v212 = vmax.f32 %v209, 0.0
    %v213 = vld [vmem:[#allocation7] sm:$0xff]
    %v214 = vld [vmem:[#allocation7 + $0x8] sm:$0xff]
    %v215 = vld [vmem:[#allocation7 + $0x10] sm:$0xff]
    %v216 = vld [vmem:[#allocation7 + $0x18] sm:$0xff]
    %v217 = vld [vmem:[#allocation7 + $0x20] sm:$0xff]
    %v218 = vld [vmem:[#allocation7 + $0x28] sm:$0xff]
    %v219 = vld [vmem:[#allocation7 + $0x30] sm:$0xff]
    %v220 = vld [vmem:[#allocation7 + $0x38] sm:$0xff]
    %v221 = vld [vmem:[#allocation7 + $0x40] sm:$0xff]
    %v222 = vld [vmem:[#allocation7 + $0x48] sm:$0xff]
    %v223 = vld [vmem:[#allocation7 + $0x50] sm:$0xff]
    %v224 = vld [vmem:[#allocation7 + $0x58] sm:$0xff]
    %v225 = vld [vmem:[#allocation7 + $0x60] sm:$0xff]
    %v226 = vld [vmem:[#allocation7 + $0x68] sm:$0xff]
    %v227 = vld [vmem:[#allocation7 + $0x70] sm:$0xff]
    %v228 = vld [vmem:[#allocation7 + $0x78] sm:$0xff]
    %v229 = vld [vmem:[#allocation7 + $0x80] sm:$0xff]
    %v230 = vld [vmem:[#allocation7 + $0x88] sm:$0xff]
    %v231 = vld [vmem:[#allocation7 + $0x90] sm:$0xff]
    %v232 = vld [vmem:[#allocation7 + $0x98] sm:$0xff]
    %v233 = vld [vmem:[#allocation7 + $0xa0] sm:$0xff]
    %v234 = vld [vmem:[#allocation7 + $0xa8] sm:$0xff]
    %v235 = vld [vmem:[#allocation7 + $0xb0] sm:$0xff]
    %v236 = vld [vmem:[#allocation7 + $0xb8] sm:$0xff]
    %v237 = vld [vmem:[#allocation7 + $0xc0] sm:$0xff]
    %v238 = vld [vmem:[#allocation7 + $0xc8] sm:$0xff]
    %v239 = vld [vmem:[#allocation7 + $0xd0] sm:$0xff]
    %v240 = vld [vmem:[#allocation7 + $0xd8] sm:$0xff]
    %v241 = vld [vmem:[#allocation7 + $0xe0] sm:$0xff]
    %v242 = vld [vmem:[#allocation7 + $0xe8] sm:$0xff]
    %v243 = vld [vmem:[#allocation7 + $0xf0] sm:$0xff]
    %v244 = vld [vmem:[#allocation7 + $0xf8] sm:$0xff]
    %v245 = vld [vmem:[#allocation7 + $0x100] sm:$0xff]
    %v246 = vld [vmem:[#allocation7 + $0x108] sm:$0xff]
    %v247 = vld [vmem:[#allocation7 + $0x110] sm:$0xff]
    %v248 = vld [vmem:[#allocation7 + $0x118] sm:$0xff]
    %v249 = vld [vmem:[#allocation7 + $0x120] sm:$0xff]
    %v250 = vld [vmem:[#allocation7 + $0x128] sm:$0xff]
    %v251 = vld [vmem:[#allocation7 + $0x130] sm:$0xff]
    %v252 = vld [vmem:[#allocation7 + $0x138] sm:$0xff]
    %v253 = vld [vmem:[#allocation7 + $0x140] sm:$0xff]
    %v254 = vld [vmem:[#allocation7 + $0x148] sm:$0xff]
    %v255 = vld [vmem:[#allocation7 + $0x150] sm:$0xff]
    %v256 = vld [vmem:[#allocation7 + $0x158] sm:$0xff]
    %v257 = vld [vmem:[#allocation7 + $0x160] sm:$0xff]
    %v258 = vld [vmem:[#allocation7 + $0x168] sm:$0xff]
    %v259 = vld [vmem:[#allocation7 + $0x170] sm:$0xff]
    %v260 = vld [vmem:[#allocation7 + $0x178] sm:$0xff]
    %v261 = vld [vmem:[#allocation7 + $0x180] sm:$0xff]
    %v262 = vld [vmem:[#allocation7 + $0x188] sm:$0xff]
    %v263 = vld [vmem:[#allocation7 + $0x190] sm:$0xff]
    %v264 = vld [vmem:[#allocation7 + $0x198] sm:$0xff]
    %v265 = vld [vmem:[#allocation7 + $0x1a0] sm:$0xff]
    %v266 = vld [vmem:[#allocation7 + $0x1a8] sm:$0xff]
    %v267 = vld [vmem:[#allocation7 + $0x1b0] sm:$0xff]
    %v268 = vld [vmem:[#allocation7 + $0x1b8] sm:$0xff]
    %v269 = vld [vmem:[#allocation7 + $0x1c0] sm:$0xff]
    %v270 = vld [vmem:[#allocation7 + $0x1c8] sm:$0xff]
    %v271 = vld [vmem:[#allocation7 + $0x1d0] sm:$0xff]
    %v272 = vld [vmem:[#allocation7 + $0x1d8] sm:$0xff]
    %v273 = vld [vmem:[#allocation7 + $0x1e0] sm:$0xff]
    %v274 = vld [vmem:[#allocation7 + $0x1e8] sm:$0xff]
    %v275 = vld [vmem:[#allocation7 + $0x1f0] sm:$0xff]
    %v276 = vld [vmem:[#allocation7 + $0x1f8] sm:$0xff]
    %v277 = vld [vmem:[%s4] sm:$0x3]
    %v279 = vlaneseq
    %v280 = vshrl.u32 %v279, 7
    %v281 = vsub.s32 0, %v280
    %v282 = vrot.slane %v277, %v281
    %v283 = vlaneseq
    %v284 = vshrl.u32 %v283, 7
    %v285 = vsub.s32 1, %v284
    %v286 = vrot.slane %v277, %v285
    %289 = vmatprep.subr.mxu0 %v214
    %290 = vmatpush1.msra.mxu0 %v213
    %291 = vmatprep.subr.mxu0 %v216
    %292 = vmatpush1.msra.mxu0 %v215
    %293 = vmatprep.subr.mxu0 %v218
    %294 = vmatpush1.msra.mxu0 %v217
    %295 = vmatprep.subr.mxu0 %v220
    %296 = vmatpush1.msra.mxu0 %v219
    %297 = vmatprep.subr.mxu0 %v222
    %298 = vmatpush1.msra.mxu0 %v221
    %299 = vmatprep.subr.mxu0 %v224
    %300 = vmatpush1.msra.mxu0 %v223
    %301 = vmatprep.subr.mxu0 %v226
    %302 = vmatpush1.msra.mxu0 %v225
    %303 = vmatprep.subr.mxu0 %v228
    %304 = vmatpush1.msra.mxu0 %v227
    %305 = vmatprep.subr.mxu0 %v230
    %306 = vmatpush1.msra.mxu0 %v229
    %307 = vmatprep.subr.mxu0 %v232
    %308 = vmatpush1.msra.mxu0 %v231
    %309 = vmatprep.subr.mxu0 %v234
    %310 = vmatpush1.msra.mxu0 %v233
    %311 = vmatprep.subr.mxu0 %v236
    %312 = vmatpush1.msra.mxu0 %v235
    %313 = vmatprep.subr.mxu0 %v238
    %314 = vmatpush1.msra.mxu0 %v237
    %315 = vmatprep.subr.mxu0 %v240
    %316 = vmatpush1.msra.mxu0 %v239
    %317 = vmatprep.subr.mxu0 %v242
    %318 = vmatpush1.msra.mxu0 %v241
    %319 = vmatprep.subr.mxu0 %v244
    %320 = vmatpush1.msra.mxu0 %v243
    %321 = vmatprep.subr.mxu0 %v246
    %322 = vmatpush1.msra.mxu0 %v245
    %323 = vmatprep.subr.mxu0 %v248
    %324 = vmatpush1.msra.mxu0 %v247
    %325 = vmatprep.subr.mxu0 %v250
    %326 = vmatpush1.msra.mxu0 %v249
    %327 = vmatprep.subr.mxu0 %v252
    %328 = vmatpush1.msra.mxu0 %v251
    %329 = vmatprep.subr.mxu0 %v254
    %330 = vmatpush1.msra.mxu0 %v253
    %331 = vmatprep.subr.mxu0 %v256
    %332 = vmatpush1.msra.mxu0 %v255
    %333 = vmatprep.subr.mxu0 %v258
    %334 = vmatpush1.msra.mxu0 %v257
    %335 = vmatprep.subr.mxu0 %v260
    %336 = vmatpush1.msra.mxu0 %v259
    %337 = vmatprep.subr.mxu0 %v262
    %338 = vmatpush1.msra.mxu0 %v261
    %339 = vmatprep.subr.mxu0 %v264
    %340 = vmatpush1.msra.mxu0 %v263
    %341 = vmatprep.subr.mxu0 %v266
    %342 = vmatpush1.msra.mxu0 %v265
    %343 = vmatprep.subr.mxu0 %v268
    %344 = vmatpush1.msra.mxu0 %v267
    %345 = vmatprep.subr.mxu0 %v270
    %346 = vmatpush1.msra.mxu0 %v269
    %347 = vmatprep.subr.mxu0 %v272
    %348 = vmatpush1.msra.mxu0 %v271
    %349 = vmatprep.subr.mxu0 %v274
    %350 = vmatpush1.msra.mxu0 %v273
    %351 = vmatprep.subr.mxu0 %v276
    %352 = vmatpush1.msra.mxu0 %v275
    %353 = vmatprep.mubr.f32.mxu0 %v212
    %354 = vmatmul.mubr.f32.gmra.mrb[0].mxu0 %v211
    %v355 = vpop.f32.mrb[0].mxu0
    %v356 = vadd.f32 %v282, %v355
    %v357 = vpop.f32.mrb[0].mxu0
    %v358 = vadd.f32 %v286, %v357
    %359 = vdwg.mxu0
    %v360 = vmax.f32 %v356, 0.0
    %v361 = vmax.f32 %v358, 0.0
    %v362 = vld [vmem:[#allocation8] sm:$0xff]
    %v363 = vld [vmem:[#allocation8 + $0x8] sm:$0xff]
    %v364 = vld [vmem:[#allocation8 + $0x10] sm:$0xff]
    %v365 = vld [vmem:[#allocation8 + $0x18] sm:$0xff]
    %v366 = vld [vmem:[#allocation8 + $0x20] sm:$0xff]
    %v367 = vld [vmem:[#allocation8 + $0x28] sm:$0xff]
    %v368 = vld [vmem:[#allocation8 + $0x30] sm:$0xff]
    %v369 = vld [vmem:[#allocation8 + $0x38] sm:$0xff]
    %v370 = vld [vmem:[#allocation8 + $0x40] sm:$0xff]
    %v371 = vld [vmem:[#allocation8 + $0x48] sm:$0xff]
    %v372 = vld [vmem:[#allocation8 + $0x50] sm:$0xff]
    %v373 = vld [vmem:[#allocation8 + $0x58] sm:$0xff]
    %v374 = vld [vmem:[#allocation8 + $0x60] sm:$0xff]
    %v375 = vld [vmem:[#allocation8 + $0x68] sm:$0xff]
    %v376 = vld [vmem:[#allocation8 + $0x70] sm:$0xff]
    %v377 = vld [vmem:[#allocation8 + $0x78] sm:$0xff]
    %v378 = vld [vmem:[#allocation8 + $0x80] sm:$0xff]
    %v379 = vld [vmem:[#allocation8 + $0x88] sm:$0xff]
    %v380 = vld [vmem:[#allocation8 + $0x90] sm:$0xff]
    %v381 = vld [vmem:[#allocation8 + $0x98] sm:$0xff]
    %v382 = vld [vmem:[#allocation8 + $0xa0] sm:$0xff]
    %v383 = vld [vmem:[#allocation8 + $0xa8] sm:$0xff]
    %v384 = vld [vmem:[#allocation8 + $0xb0] sm:$0xff]
    %v385 = vld [vmem:[#allocation8 + $0xb8] sm:$0xff]
    %v386 = vld [vmem:[#allocation8 + $0xc0] sm:$0xff]
    %v387 = vld [vmem:[#allocation8 + $0xc8] sm:$0xff]
    %v388 = vld [vmem:[#allocation8 + $0xd0] sm:$0xff]
    %v389 = vld [vmem:[#allocation8 + $0xd8] sm:$0xff]
    %v390 = vld [vmem:[#allocation8 + $0xe0] sm:$0xff]
    %v391 = vld [vmem:[#allocation8 + $0xe8] sm:$0xff]
    %v392 = vld [vmem:[#allocation8 + $0xf0] sm:$0xff]
    %v393 = vld [vmem:[#allocation8 + $0xf8] sm:$0xff]
    %v394 = vld [vmem:[#allocation8 + $0x100] sm:$0xff]
    %v395 = vld [vmem:[#allocation8 + $0x108] sm:$0xff]
    %v396 = vld [vmem:[#allocation8 + $0x110] sm:$0xff]
    %v397 = vld [vmem:[#allocation8 + $0x118] sm:$0xff]
    %v398 = vld [vmem:[#allocation8 + $0x120] sm:$0xff]
    %v399 = vld [vmem:[#allocation8 + $0x128] sm:$0xff]
    %v400 = vld [vmem:[#allocation8 + $0x130] sm:$0xff]
    %v401 = vld [vmem:[#allocation8 + $0x138] sm:$0xff]
    %v402 = vld [vmem:[#allocation8 + $0x140] sm:$0xff]
    %v403 = vld [vmem:[#allocation8 + $0x148] sm:$0xff]
    %v404 = vld [vmem:[#allocation8 + $0x150] sm:$0xff]
    %v405 = vld [vmem:[#allocation8 + $0x158] sm:$0xff]
    %v406 = vld [vmem:[#allocation8 + $0x160] sm:$0xff]
    %v407 = vld [vmem:[#allocation8 + $0x168] sm:$0xff]
    %v408 = vld [vmem:[#allocation8 + $0x170] sm:$0xff]
    %v409 = vld [vmem:[#allocation8 + $0x178] sm:$0xff]
    %v410 = vld [vmem:[#allocation8 + $0x180] sm:$0xff]
    %v411 = vld [vmem:[#allocation8 + $0x188] sm:$0xff]
    %v412 = vld [vmem:[#allocation8 + $0x190] sm:$0xff]
    %v413 = vld [vmem:[#allocation8 + $0x198] sm:$0xff]
    %v414 = vld [vmem:[#allocation8 + $0x1a0] sm:$0xff]
    %v415 = vld [vmem:[#allocation8 + $0x1a8] sm:$0xff]
    %v416 = vld [vmem:[#allocation8 + $0x1b0] sm:$0xff]
    %v417 = vld [vmem:[#allocation8 + $0x1b8] sm:$0xff]
    %v418 = vld [vmem:[#allocation8 + $0x1c0] sm:$0xff]
    %v419 = vld [vmem:[#allocation8 + $0x1c8] sm:$0xff]
    %v420 = vld [vmem:[#allocation8 + $0x1d0] sm:$0xff]
    %v421 = vld [vmem:[#allocation8 + $0x1d8] sm:$0xff]
    %v422 = vld [vmem:[#allocation8 + $0x1e0] sm:$0xff]
    %v423 = vld [vmem:[#allocation8 + $0x1e8] sm:$0xff]
    %v424 = vld [vmem:[#allocation8 + $0x1f0] sm:$0xff]
    %v425 = vld [vmem:[#allocation8 + $0x1f8] sm:$0xff]
    %v426 = vld [vmem:[%s6] sm:$0x3]
    %v428 = vlaneseq
    %v429 = vshrl.u32 %v428, 7
    %v430 = vsub.s32 0, %v429
    %v431 = vrot.slane %v426, %v430
    %v432 = vlaneseq
    %v433 = vshrl.u32 %v432, 7
    %v434 = vsub.s32 1, %v433
    %v435 = vrot.slane %v426, %v434
    %438 = vmatprep.subr.mxu0 %v363
    %439 = vmatpush1.msra.mxu0 %v362
    %440 = vmatprep.subr.mxu0 %v365
    %441 = vmatpush1.msra.mxu0 %v364
    %442 = vmatprep.subr.mxu0 %v367
    %443 = vmatpush1.msra.mxu0 %v366
    %444 = vmatprep.subr.mxu0 %v369
    %445 = vmatpush1.msra.mxu0 %v368
    %446 = vmatprep.subr.mxu0 %v371
    %447 = vmatpush1.msra.mxu0 %v370
    %448 = vmatprep.subr.mxu0 %v373
    %449 = vmatpush1.msra.mxu0 %v372
    %450 = vmatprep.subr.mxu0 %v375
    %451 = vmatpush1.msra.mxu0 %v374
    %452 = vmatprep.subr.mxu0 %v377
    %453 = vmatpush1.msra.mxu0 %v376
    %454 = vmatprep.subr.mxu0 %v379
    %455 = vmatpush1.msra.mxu0 %v378
    %456 = vmatprep.subr.mxu0 %v381
    %457 = vmatpush1.msra.mxu0 %v380
    %458 = vmatprep.subr.mxu0 %v383
    %459 = vmatpush1.msra.mxu0 %v382
    %460 = vmatprep.subr.mxu0 %v385
    %461 = vmatpush1.msra.mxu0 %v384
    %462 = vmatprep.subr.mxu0 %v387
    %463 = vmatpush1.msra.mxu0 %v386
    %464 = vmatprep.subr.mxu0 %v389
    %465 = vmatpush1.msra.mxu0 %v388
    %466 = vmatprep.subr.mxu0 %v391
    %467 = vmatpush1.msra.mxu0 %v390
    %468 = vmatprep.subr.mxu0 %v393
    %469 = vmatpush1.msra.mxu0 %v392
    %470 = vmatprep.subr.mxu0 %v395
    %471 = vmatpush1.msra.mxu0 %v394
    %472 = vmatprep.subr.mxu0 %v397
    %473 = vmatpush1.msra.mxu0 %v396
    %474 = vmatprep.subr.mxu0 %v399
    %475 = vmatpush1.msra.mxu0 %v398
    %476 = vmatprep.subr.mxu0 %v401
    %477 = vmatpush1.msra.mxu0 %v400
    %478 = vmatprep.subr.mxu0 %v403
    %479 = vmatpush1.msra.mxu0 %v402
    %480 = vmatprep.subr.mxu0 %v405
    %481 = vmatpush1.msra.mxu0 %v404
    %482 = vmatprep.subr.mxu0 %v407
    %483 = vmatpush1.msra.mxu0 %v406
    %484 = vmatprep.subr.mxu0 %v409
    %485 = vmatpush1.msra.mxu0 %v408
    %486 = vmatprep.subr.mxu0 %v411
    %487 = vmatpush1.msra.mxu0 %v410
    %488 = vmatprep.subr.mxu0 %v413
    %489 = vmatpush1.msra.mxu0 %v412
    %490 = vmatprep.subr.mxu0 %v415
    %491 = vmatpush1.msra.mxu0 %v414
    %492 = vmatprep.subr.mxu0 %v417
    %493 = vmatpush1.msra.mxu0 %v416
    %494 = vmatprep.subr.mxu0 %v419
    %495 = vmatpush1.msra.mxu0 %v418
    %496 = vmatprep.subr.mxu0 %v421
    %497 = vmatpush1.msra.mxu0 %v420
    %498 = vmatprep.subr.mxu0 %v423
    %499 = vmatpush1.msra.mxu0 %v422
    %500 = vmatprep.subr.mxu0 %v425
    %501 = vmatpush1.msra.mxu0 %v424
    %502 = vmatprep.mubr.f32.mxu0 %v361
    %503 = vmatmul.mubr.f32.gmra.mrb[0].mxu0 %v360
    %v504 = vpop.f32.mrb[0].mxu0
    %v505 = vadd.f32 %v431, %v504
    %v506 = vpop.f32.mrb[0].mxu0
    %v507 = vadd.f32 %v435, %v506
    %508 = vdwg.mxu0
    %v509 = vmax.f32 %v505, 0.0
    %v510 = vmax.f32 %v507, 0.0
    %v511 = vld [vmem:[#allocation10] sm:$0xff]
    %v512 = vld [vmem:[#allocation10 + $0x8] sm:$0xff]
    %v513 = vld [vmem:[#allocation10 + $0x10] sm:$0xff]
    %v514 = vld [vmem:[#allocation10 + $0x18] sm:$0xff]
    %v515 = vld [vmem:[#allocation10 + $0x20] sm:$0xff]
    %v516 = vld [vmem:[#allocation10 + $0x28] sm:$0xff]
    %v517 = vld [vmem:[#allocation10 + $0x30] sm:$0xff]
    %v518 = vld [vmem:[#allocation10 + $0x38] sm:$0xff]
    %v519 = vld [vmem:[#allocation10 + $0x40] sm:$0xff]
    %v520 = vld [vmem:[#allocation10 + $0x48] sm:$0xff]
    %v521 = vld [vmem:[#allocation10 + $0x50] sm:$0xff]
    %v522 = vld [vmem:[#allocation10 + $0x58] sm:$0xff]
    %v523 = vld [vmem:[#allocation10 + $0x60] sm:$0xff]
    %v524 = vld [vmem:[#allocation10 + $0x68] sm:$0xff]
    %v525 = vld [vmem:[#allocation10 + $0x70] sm:$0xff]
    %v526 = vld [vmem:[#allocation10 + $0x78] sm:$0xff]
    %v527 = vld [vmem:[#allocation10 + $0x80] sm:$0xff]
    %v528 = vld [vmem:[#allocation10 + $0x88] sm:$0xff]
    %v529 = vld [vmem:[#allocation10 + $0x90] sm:$0xff]
    %v530 = vld [vmem:[#allocation10 + $0x98] sm:$0xff]
    %v531 = vld [vmem:[#allocation10 + $0xa0] sm:$0xff]
    %v532 = vld [vmem:[#allocation10 + $0xa8] sm:$0xff]
    %v533 = vld [vmem:[#allocation10 + $0xb0] sm:$0xff]
    %v534 = vld [vmem:[#allocation10 + $0xb8] sm:$0xff]
    %v535 = vld [vmem:[#allocation10 + $0xc0] sm:$0xff]
    %v536 = vld [vmem:[#allocation10 + $0xc8] sm:$0xff]
    %v537 = vld [vmem:[#allocation10 + $0xd0] sm:$0xff]
    %v538 = vld [vmem:[#allocation10 + $0xd8] sm:$0xff]
    %v539 = vld [vmem:[#allocation10 + $0xe0] sm:$0xff]
    %v540 = vld [vmem:[#allocation10 + $0xe8] sm:$0xff]
    %v541 = vld [vmem:[#allocation10 + $0xf0] sm:$0xff]
    %v542 = vld [vmem:[#allocation10 + $0xf8] sm:$0xff]
    %v543 = vld [vmem:[#allocation10 + $0x100] sm:$0xff]
    %v544 = vld [vmem:[#allocation10 + $0x108] sm:$0xff]
    %v545 = vld [vmem:[#allocation10 + $0x110] sm:$0xff]
    %v546 = vld [vmem:[#allocation10 + $0x118] sm:$0xff]
    %v547 = vld [vmem:[#allocation10 + $0x120] sm:$0xff]
    %v548 = vld [vmem:[#allocation10 + $0x128] sm:$0xff]
    %v549 = vld [vmem:[#allocation10 + $0x130] sm:$0xff]
    %v550 = vld [vmem:[#allocation10 + $0x138] sm:$0xff]
    %v551 = vld [vmem:[#allocation10 + $0x140] sm:$0xff]
    %v552 = vld [vmem:[#allocation10 + $0x148] sm:$0xff]
    %v553 = vld [vmem:[#allocation10 + $0x150] sm:$0xff]
    %v554 = vld [vmem:[#allocation10 + $0x158] sm:$0xff]
    %v555 = vld [vmem:[#allocation10 + $0x160] sm:$0xff]
    %v556 = vld [vmem:[#allocation10 + $0x168] sm:$0xff]
    %v557 = vld [vmem:[#allocation10 + $0x170] sm:$0xff]
    %v558 = vld [vmem:[#allocation10 + $0x178] sm:$0xff]
    %v559 = vld [vmem:[#allocation10 + $0x180] sm:$0xff]
    %v560 = vld [vmem:[#allocation10 + $0x188] sm:$0xff]
    %v561 = vld [vmem:[#allocation10 + $0x190] sm:$0xff]
    %v562 = vld [vmem:[#allocation10 + $0x198] sm:$0xff]
    %v563 = vld [vmem:[#allocation10 + $0x1a0] sm:$0xff]
    %v564 = vld [vmem:[#allocation10 + $0x1a8] sm:$0xff]
    %v565 = vld [vmem:[#allocation10 + $0x1b0] sm:$0xff]
    %v566 = vld [vmem:[#allocation10 + $0x1b8] sm:$0xff]
    %v567 = vld [vmem:[#allocation10 + $0x1c0] sm:$0xff]
    %v568 = vld [vmem:[#allocation10 + $0x1c8] sm:$0xff]
    %v569 = vld [vmem:[#allocation10 + $0x1d0] sm:$0xff]
    %v570 = vld [vmem:[#allocation10 + $0x1d8] sm:$0xff]
    %v571 = vld [vmem:[#allocation10 + $0x1e0] sm:$0xff]
    %v572 = vld [vmem:[#allocation10 + $0x1e8] sm:$0xff]
    %v573 = vld [vmem:[#allocation10 + $0x1f0] sm:$0xff]
    %v574 = vld [vmem:[#allocation10 + $0x1f8] sm:$0xff]
    %v575 = vld [vmem:[%s8] sm:$0x3]
    %v577 = vlaneseq
    %v578 = vshrl.u32 %v577, 7
    %v579 = vsub.s32 0, %v578
    %v580 = vrot.slane %v575, %v579
    %v581 = vlaneseq
    %v582 = vshrl.u32 %v581, 7
    %v583 = vsub.s32 1, %v582
    %v584 = vrot.slane %v575, %v583
    %587 = vmatprep.subr.mxu0 %v512
    %588 = vmatpush1.msra.mxu0 %v511
    %589 = vmatprep.subr.mxu0 %v514
    %590 = vmatpush1.msra.mxu0 %v513
    %591 = vmatprep.subr.mxu0 %v516
    %592 = vmatpush1.msra.mxu0 %v515
    %593 = vmatprep.subr.mxu0 %v518
    %594 = vmatpush1.msra.mxu0 %v517
    %595 = vmatprep.subr.mxu0 %v520
    %596 = vmatpush1.msra.mxu0 %v519
    %597 = vmatprep.subr.mxu0 %v522
    %598 = vmatpush1.msra.mxu0 %v521
    %599 = vmatprep.subr.mxu0 %v524
    %600 = vmatpush1.msra.mxu0 %v523
    %601 = vmatprep.subr.mxu0 %v526
    %602 = vmatpush1.msra.mxu0 %v525
    %603 = vmatprep.subr.mxu0 %v528
    %604 = vmatpush1.msra.mxu0 %v527
    %605 = vmatprep.subr.mxu0 %v530
    %606 = vmatpush1.msra.mxu0 %v529
    %607 = vmatprep.subr.mxu0 %v532
    %608 = vmatpush1.msra.mxu0 %v531
    %609 = vmatprep.subr.mxu0 %v534
    %610 = vmatpush1.msra.mxu0 %v533
    %611 = vmatprep.subr.mxu0 %v536
    %612 = vmatpush1.msra.mxu0 %v535
    %613 = vmatprep.subr.mxu0 %v538
    %614 = vmatpush1.msra.mxu0 %v537
    %615 = vmatprep.subr.mxu0 %v540
    %616 = vmatpush1.msra.mxu0 %v539
    %617 = vmatprep.subr.mxu0 %v542
    %618 = vmatpush1.msra.mxu0 %v541
    %619 = vmatprep.subr.mxu0 %v544
    %620 = vmatpush1.msra.mxu0 %v543
    %621 = vmatprep.subr.mxu0 %v546
    %622 = vmatpush1.msra.mxu0 %v545
    %623 = vmatprep.subr.mxu0 %v548
    %624 = vmatpush1.msra.mxu0 %v547
    %625 = vmatprep.subr.mxu0 %v550
    %626 = vmatpush1.msra.mxu0 %v549
    %627 = vmatprep.subr.mxu0 %v552
    %628 = vmatpush1.msra.mxu0 %v551
    %629 = vmatprep.subr.mxu0 %v554
    %630 = vmatpush1.msra.mxu0 %v553
    %631 = vmatprep.subr.mxu0 %v556
    %632 = vmatpush1.msra.mxu0 %v555
    %633 = vmatprep.subr.mxu0 %v558
    %634 = vmatpush1.msra.mxu0 %v557
    %635 = vmatprep.subr.mxu0 %v560
    %636 = vmatpush1.msra.mxu0 %v559
    %637 = vmatprep.subr.mxu0 %v562
    %638 = vmatpush1.msra.mxu0 %v561
    %639 = vmatprep.subr.mxu0 %v564
    %640 = vmatpush1.msra.mxu0 %v563
    %641 = vmatprep.subr.mxu0 %v566
    %642 = vmatpush1.msra.mxu0 %v565
    %643 = vmatprep.subr.mxu0 %v568
    %644 = vmatpush1.msra.mxu0 %v567
    %645 = vmatprep.subr.mxu0 %v570
    %646 = vmatpush1.msra.mxu0 %v569
    %647 = vmatprep.subr.mxu0 %v572
    %648 = vmatpush1.msra.mxu0 %v571
    %649 = vmatprep.subr.mxu0 %v574
    %650 = vmatpush1.msra.mxu0 %v573
    %651 = vmatprep.mubr.f32.mxu0 %v510
    %652 = vmatmul.mubr.f32.gmra.mrb[0].mxu0 %v509
    %v653 = vpop.f32.mrb[0].mxu0
    %v654 = vadd.f32 %v580, %v653
    %v655 = vpop.f32.mrb[0].mxu0
    %v656 = vadd.f32 %v584, %v655
    %657 = vdwg.mxu0
    %v658 = vmax.f32 %v654, 0.0
    %v659 = vmax.f32 %v656, 0.0
    %v660 = vld [vmem:[#allocation11] sm:$0xff]
    %v661 = vld [vmem:[#allocation11 + $0x8] sm:$0xff]
    %v662 = vld [vmem:[#allocation11 + $0x10] sm:$0xff]
    %v663 = vld [vmem:[#allocation11 + $0x18] sm:$0xff]
    %v664 = vld [vmem:[#allocation11 + $0x20] sm:$0xff]
    %v665 = vld [vmem:[#allocation11 + $0x28] sm:$0xff]
    %v666 = vld [vmem:[#allocation11 + $0x30] sm:$0xff]
    %v667 = vld [vmem:[#allocation11 + $0x38] sm:$0xff]
    %v668 = vld [vmem:[#allocation11 + $0x40] sm:$0xff]
    %v669 = vld [vmem:[#allocation11 + $0x48] sm:$0xff]
    %v670 = vld [vmem:[#allocation11 + $0x50] sm:$0xff]
    %v671 = vld [vmem:[#allocation11 + $0x58] sm:$0xff]
    %v672 = vld [vmem:[#allocation11 + $0x60] sm:$0xff]
    %v673 = vld [vmem:[#allocation11 + $0x68] sm:$0xff]
    %v674 = vld [vmem:[#allocation11 + $0x70] sm:$0xff]
    %v675 = vld [vmem:[#allocation11 + $0x78] sm:$0xff]
    %v676 = vld [vmem:[#allocation11 + $0x80] sm:$0xff]
    %v677 = vld [vmem:[#allocation11 + $0x88] sm:$0xff]
    %v678 = vld [vmem:[#allocation11 + $0x90] sm:$0xff]
    %v679 = vld [vmem:[#allocation11 + $0x98] sm:$0xff]
    %v680 = vld [vmem:[#allocation11 + $0xa0] sm:$0xff]
    %v681 = vld [vmem:[#allocation11 + $0xa8] sm:$0xff]
    %v682 = vld [vmem:[#allocation11 + $0xb0] sm:$0xff]
    %v683 = vld [vmem:[#allocation11 + $0xb8] sm:$0xff]
    %v684 = vld [vmem:[#allocation11 + $0xc0] sm:$0xff]
    %v685 = vld [vmem:[#allocation11 + $0xc8] sm:$0xff]
    %v686 = vld [vmem:[#allocation11 + $0xd0] sm:$0xff]
    %v687 = vld [vmem:[#allocation11 + $0xd8] sm:$0xff]
    %v688 = vld [vmem:[#allocation11 + $0xe0] sm:$0xff]
    %v689 = vld [vmem:[#allocation11 + $0xe8] sm:$0xff]
    %v690 = vld [vmem:[#allocation11 + $0xf0] sm:$0xff]
    %v691 = vld [vmem:[#allocation11 + $0xf8] sm:$0xff]
    %v692 = vld [vmem:[%s10] sm:$0x1]
    %693 = vmatprep.subr.mxu0 0.0
    %694 = vmatpush1.msra.mxu0 %v660
    %695 = vmatprep.subr.mxu0 0.0
    %696 = vmatpush1.msra.mxu0 %v661
    %697 = vmatprep.subr.mxu0 0.0
    %698 = vmatpush1.msra.mxu0 %v662
    %699 = vmatprep.subr.mxu0 0.0
    %700 = vmatpush1.msra.mxu0 %v663
    %701 = vmatprep.subr.mxu0 0.0
    %702 = vmatpush1.msra.mxu0 %v664
    %703 = vmatprep.subr.mxu0 0.0
    %704 = vmatpush1.msra.mxu0 %v665
    %705 = vmatprep.subr.mxu0 0.0
    %706 = vmatpush1.msra.mxu0 %v666
    %707 = vmatprep.subr.mxu0 0.0
    %708 = vmatpush1.msra.mxu0 %v667
    %709 = vmatprep.subr.mxu0 0.0
    %710 = vmatpush1.msra.mxu0 %v668
    %711 = vmatprep.subr.mxu0 0.0
    %712 = vmatpush1.msra.mxu0 %v669
    %713 = vmatprep.subr.mxu0 0.0
    %714 = vmatpush1.msra.mxu0 %v670
    %715 = vmatprep.subr.mxu0 0.0
    %716 = vmatpush1.msra.mxu0 %v671
    %717 = vmatprep.subr.mxu0 0.0
    %718 = vmatpush1.msra.mxu0 %v672
    %719 = vmatprep.subr.mxu0 0.0
    %720 = vmatpush1.msra.mxu0 %v673
    %721 = vmatprep.subr.mxu0 0.0
    %722 = vmatpush1.msra.mxu0 %v674
    %723 = vmatprep.subr.mxu0 0.0
    %724 = vmatpush1.msra.mxu0 %v675
    %725 = vmatprep.subr.mxu0 0.0
    %726 = vmatpush1.msra.mxu0 %v676
    %727 = vmatprep.subr.mxu0 0.0
    %728 = vmatpush1.msra.mxu0 %v677
    %729 = vmatprep.subr.mxu0 0.0
    %730 = vmatpush1.msra.mxu0 %v678
    %731 = vmatprep.subr.mxu0 0.0
    %732 = vmatpush1.msra.mxu0 %v679
    %733 = vmatprep.subr.mxu0 0.0
    %734 = vmatpush1.msra.mxu0 %v680
    %735 = vmatprep.subr.mxu0 0.0
    %736 = vmatpush1.msra.mxu0 %v681
    %737 = vmatprep.subr.mxu0 0.0
    %738 = vmatpush1.msra.mxu0 %v682
    %739 = vmatprep.subr.mxu0 0.0
    %740 = vmatpush1.msra.mxu0 %v683
    %741 = vmatprep.subr.mxu0 0.0
    %742 = vmatpush1.msra.mxu0 %v684
    %743 = vmatprep.subr.mxu0 0.0
    %744 = vmatpush1.msra.mxu0 %v685
    %745 = vmatprep.subr.mxu0 0.0
    %746 = vmatpush1.msra.mxu0 %v686
    %747 = vmatprep.subr.mxu0 0.0
    %748 = vmatpush1.msra.mxu0 %v687
    %749 = vmatprep.subr.mxu0 0.0
    %750 = vmatpush1.msra.mxu0 %v688
    %751 = vmatprep.subr.mxu0 0.0
    %752 = vmatpush1.msra.mxu0 %v689
    %753 = vmatprep.subr.mxu0 0.0
    %754 = vmatpush1.msra.mxu0 %v690
    %755 = vmatprep.subr.mxu0 0.0
    %756 = vmatpush1.msra.mxu0 %v691
    %757 = vmatprep.mubr.f32.mxu0 %v659
    %758 = vmatmul.mubr.f32.gmra.mrb[0].mxu0 %v658
    %v759 = vpop.f32.mrb[0].mxu0
    %v760 = vadd.f32 %v692, %v759
    %v761 = vpop.f32.mrb[0].mxu0
    %762 = vdwg.mxu0
    %v763 = vmax.f32 %v760, 0.0
    %764 = vst [vmem:[#allocation13] sm:$0x1] %v763
    // Predicated region
    $region70: #{tpu_custom_call.1} parent=1 // pred_check
      _
    $region71: #{tpu_custom_call.1} parent=1 // pred_check_branch
      %766 = sbr.rel (0) target = $region73
    $region72: #{tpu_custom_call.1} parent=1 // pred_region
      %s768 = ssub.s32 16, 16
      %769 = vsyncadd [#allocation4], %s768
      %s771 = sshll.u32 [#allocation13], 4
      %s772 = int_to_ptr.vmem [resolvable:$true] %s771
      %774 = dma.vmem_to_hbm [thread:$0]  %s772, 16, %s11, [#allocation4]
    $region73: #{tpu_custom_call.1} parent=1 // pred_fallthru
      _
    // Predicated region
    $region74: #{tpu_custom_call.1} parent=1 // pred_check
      _
    $region75: #{tpu_custom_call.1} parent=1 // pred_check_branch
      %776 = sbr.rel (0) target = $region77
    $region76: #{tpu_custom_call.1} parent=1 // pred_region
      %777 = dma.done [#allocation4], 16
    $region77: #{tpu_custom_call.1} parent=1 // pred_fallthru
      _
    %778 = vsyncpa [#allocation3], 1
    %779 = vsyncpa [#allocation6], 1
    %780 = vsyncpa [#allocation9], 1
    %781 = vsyncpa [#allocation12], 1
    %782 = vsyncpa [#allocation4], 1

</llo_original>
